<compile_context>
chip_gen: v7x
topology: tpu7x:2x2x1
jax: 0.10.0
libtpu: 0.0.40
codegen_flags: <defaults>
</compile_context>

<pallas_src>
import jax
import jax.numpy as jnp
from jax.experimental import pallas as pl
from jax.experimental.pallas import tpu as pltpu


BT = 8         # batch tile (sublane multiple)
OUT_PAD = 128  # lane-dense output tile


def rnn_kernel(x_ref, wih_ref, bias_ref, whh_ref, wout_ref, bout_ref,
               y_ref, h_ref):
    """One (batch-tile, time-chunk) grid step.

    x_ref    : (TC, BT, D_in)   time-chunk of the batch-padded input
    wih_ref  : (D_in, H_pad)    W_ih^T   (zero-padded, constant block)
    bias_ref : (1, H_pad)       b_ih + b_hh fused (zero-padded, constant block)
    whh_ref  : (H_pad, H_pad)   W_hh^T   (zero-padded, constant block)
    wout_ref : (H_pad, OUT_PAD) W_out^T padded to 128 output lanes
    bout_ref : (1, OUT_PAD)     b_out padded to 128 output lanes
    y_ref    : (BT, OUT_PAD)    y lives in column 0 (written on the last chunk)
    h_ref    : (BT, H_pad)      persistent hidden-state scratch (carried over chunks)
    """
    c = pl.program_id(1)
    nc = pl.num_programs(1)
    TC, BT_, D_in = x_ref.shape
    H_pad = whh_ref.shape[0]

    @pl.when(c == 0)
    def _():
        h_ref[...] = jnp.zeros_like(h_ref)

    # ---- Chunk-local input projection: xp[t] = x[t] @ W_ih^T + (b_ih + b_hh) ----
    # For tiny D_in this is D_in VPU broadcast-FMAs (lane-broadcast of a single input
    # feature times one weight row), keeping the MXU free for the recurrence.
    if D_in <= 8:
        xp = x_ref[:, :, 0:1] * wih_ref[0:1, :] + bias_ref[...]
        for d in range(1, D_in):
            xp = xp + x_ref[:, :, d:d + 1] * wih_ref[d:d + 1, :]
    else:
        xflat = x_ref[...].reshape(TC * BT_, D_in)
        xp = (jnp.dot(xflat, wih_ref[...], preferred_element_type=jnp.float32)
              + bias_ref[...]).reshape(TC, BT_, H_pad)

    # ---- Serial recurrence over this chunk (bounded unroll, static indices) ----
    hoist_whh = H_pad <= 128          # 16/64 vregs: safe to pin; larger H re-reads
    whh = whh_ref[...] if hoist_whh else None

    h = h_ref[...]
    for t in range(TC):
        rec = jnp.dot(h, whh if hoist_whh else whh_ref[...],
                      preferred_element_type=jnp.float32)
        h = jnp.tanh(xp[t] + rec)
    h_ref[...] = h

    # ---- Final Linear on the last hidden state (lane-dense 128-wide store) ----
    @pl.when(c == nc - 1)
    def _():
        y_ref[...] = (jnp.dot(h, wout_ref[...], preferred_element_type=jnp.float32)
                      + bout_ref[...])


def _choose_time_chunk(T):
    for cand in (16, 8, 4, 2, 1):
        if T % cand == 0:
            return cand
    return 1


def prepare_params(params):
    """Pad / fuse model constants once (hoisted out of the per-call path)."""
    D_in, H = params["wih_t"].shape
    H_pad = max(128, ((H + 127) // 128) * 128)
    f32 = jnp.float32
    # Zero padding keeps the recurrence exact: padded h columns stay 0 (tanh(0)=0).
    wih = jnp.zeros((D_in, H_pad), f32).at[:, :H].set(params["wih_t"])
    whh = jnp.zeros((H_pad, H_pad), f32).at[:H, :H].set(params["whh_t"])
    bias = jnp.zeros((1, H_pad), f32).at[:, :H].set(params["bih"] + params["bhh"])
    wout = jnp.zeros((H_pad, OUT_PAD), f32).at[:H, :1].set(params["wout_t"])
    bout = jnp.zeros((1, OUT_PAD), f32).at[:, :1].set(params["bout"])
    return {"wih": wih, "whh": whh, "bias": bias, "wout": wout, "bout": bout}


def rnn_model_forward(x, prep):
    """x: (B, T, D_in) float32 (batch_first, like PyTorch). Returns (B, 1)."""
    B, T, D_in = x.shape
    H_pad = prep["whh"].shape[0]
    f32 = jnp.float32

    nb = -(-B // BT)                 # batch tiles
    B_pad = nb * BT
    TC = _choose_time_chunk(T)       # bounded per-chunk unroll
    nc = T // TC

    # batch_first (B,T,D) -> time-major, batch-padded (T, B_pad, D_in)
    # TODO(synk): consider allow_input_fusion so this transpose/pad fuses into the
    # pallas_call input DMA.
    x_t = jnp.transpose(x, (1, 0, 2)).astype(f32)
    x_pad = jnp.pad(x_t, ((0, 0), (0, B_pad - B), (0, 0)))

    def const_spec(shape):
        # constant weight block: same tile every grid step, single-buffered.
        return pl.BlockSpec(shape, lambda b, c: (0,) * len(shape),
                            pipeline_mode=pl.Buffered(1))

    grid_spec = pltpu.PrefetchScalarGridSpec(
        num_scalar_prefetch=0,
        grid=(nb, nc),
        in_specs=[
            pl.BlockSpec((TC, BT, D_in), lambda b, c: (c, b, 0)),   # streamed x
            const_spec(prep["wih"].shape),
            const_spec(prep["bias"].shape),
            const_spec(prep["whh"].shape),
            const_spec(prep["wout"].shape),
            const_spec(prep["bout"].shape),
        ],
        out_specs=pl.BlockSpec((BT, OUT_PAD), lambda b, c: (b, 0)),
        scratch_shapes=[pltpu.VMEM((BT, H_pad), f32)],              # persistent h
    )

    y_pad = pl.pallas_call(
        rnn_kernel,
        out_shape=jax.ShapeDtypeStruct((B_pad, OUT_PAD), f32),
        grid_spec=grid_spec,
        compiler_params=pltpu.CompilerParams(
            # batch tiles are independent (2 TCs on v7x); time chunks are a
            # sequential recurrence.
            dimension_semantics=("parallel", "arbitrary"),
            vmem_limit_bytes=64 * 1024 * 1024,
        ),
    )(x_pad, prep["wih"], prep["bias"], prep["whh"], prep["wout"], prep["bout"])

    return y_pad[:B, :1]


rnn_model_forward_jit = jax.jit(rnn_model_forward)


def rnn_model_reference(x, params):
    """Pure-JAX reference matching torch.nn.RNN(tanh) + Linear semantics."""
    B, T, D_in = x.shape
    H = params["whh_t"].shape[0]
    h = jnp.zeros((B, H), jnp.float32)
    for t in range(T):
        h = jnp.tanh(x[:, t, :] @ params["wih_t"] + params["bih"]
                     + h @ params["whh_t"] + params["bhh"])
    return h @ params["wout_t"] + params["bout"]


def init_params(key, input_size, hidden_size):
    """Deterministic init mirroring PyTorch's uniform(-1/sqrt(H), 1/sqrt(H))."""
    k = 1.0 / jnp.sqrt(jnp.float32(hidden_size))
    ks = jax.random.split(key, 6)
    u = lambda kk, shape: jax.random.uniform(kk, shape, jnp.float32, -k, k)
    return {
        # stored pre-transposed relative to PyTorch layout
        "wih_t": u(ks[0], (input_size, hidden_size)),   # = W_ih^T
        "whh_t": u(ks[1], (hidden_size, hidden_size)),  # = W_hh^T
        "bih": u(ks[2], (1, hidden_size)),
        "bhh": u(ks[3], (1, hidden_size)),
        "wout_t": u(ks[4], (hidden_size, 1)),           # = W_out^T
        "bout": u(ks[5], (1, 1)),
    }


if __name__ == "__main__":
    B, T, D_in, H = 2, 8, 4, 32
    key = jax.random.PRNGKey(0)
    kx, kp = jax.random.split(key)
    x = jax.random.normal(kx, (B, T, D_in), jnp.float32)
    params = init_params(kp, D_in, H)

    prep = prepare_params(params)           # model constants: padded once
    y = rnn_model_forward_jit(x, prep)
    jax.block_until_ready(y)

    y_ref = rnn_model_reference(x, params)
    assert y.shape == (B, 1)
    assert jnp.allclose(y, y_ref, atol=5e-5, rtol=1e-4), (y, y_ref)

    print("KERNEL_OK")
</pallas_src>

<mosaic_0001>
module attributes {stable_mosaic.version = 11 : i64} {
  func.func @rnn_kernel(%arg0: i32, %arg1: i32, %arg2: memref<8x8x4xf32, #tpu.memory_space<vmem>>, %arg3: memref<4x128xf32, #tpu.memory_space<vmem>>, %arg4: memref<1x128xf32, #tpu.memory_space<vmem>>, %arg5: memref<128x128xf32, #tpu.memory_space<vmem>>, %arg6: memref<128x128xf32, #tpu.memory_space<vmem>>, %arg7: memref<1x128xf32, #tpu.memory_space<vmem>>, %arg8: memref<8x128xf32, #tpu.memory_space<vmem>>, %arg9: memref<8x128xf32, #tpu.memory_space<vmem>>) attributes {dimension_semantics = [#tpu.dimension_semantics<parallel>, #tpu.dimension_semantics<arbitrary>], iteration_bounds = array<i64: 1, 1>, scalar_prefetch = 0 : i64, scratch_operands = 1 : i64, tpu.core_type = #tpu.core_type<tc>, window_params = [{transform_indices = @transform_0, window_bounds = array<i64: 8, 8, 4>}, {pipeline_mode = #tpu.pipeline_mode<synchronous>, transform_indices = @transform_1, window_bounds = array<i64: 4, 128>}, {pipeline_mode = #tpu.pipeline_mode<synchronous>, transform_indices = @transform_2, window_bounds = array<i64: 1, 128>}, {pipeline_mode = #tpu.pipeline_mode<synchronous>, transform_indices = @transform_3, window_bounds = array<i64: 128, 128>}, {pipeline_mode = #tpu.pipeline_mode<synchronous>, transform_indices = @transform_4, window_bounds = array<i64: 128, 128>}, {pipeline_mode = #tpu.pipeline_mode<synchronous>, transform_indices = @transform_5, window_bounds = array<i64: 1, 128>}, {transform_indices = @transform_6, window_bounds = array<i64: 8, 128>}]} {
    %c0_i32 = arith.constant 0 : i32
    %0 = arith.cmpi eq, %arg1, %c0_i32 : i32
    %1 = arith.extui %0 : i1 to i32
    %c0_i32_0 = arith.constant 0 : i32
    %2 = arith.cmpi ne, %1, %c0_i32_0 : i32
    scf.if %2 {
      %cst_34 = arith.constant 0.000000e+00 : f32
      %80 = vector.broadcast %cst_34 : f32 to vector<8x128xf32>
      %c0_35 = arith.constant 0 : index
      %c0_36 = arith.constant 0 : index
      %81 = vector.load %arg9[%c0_35, %c0_36] : memref<8x128xf32, #tpu.memory_space<vmem>>, vector<8x128xf32>
      tpu.vector_store %arg9[%c0_35, %c0_36], %80 {strides = array<i32>} : memref<8x128xf32, #tpu.memory_space<vmem>>, vector<8x128xf32>,
    } else {
    }
    %c0 = arith.constant 0 : index
    %c0_1 = arith.constant 0 : index
    %c0_2 = arith.constant 0 : index
    %3 = vector.load %arg2[%c0, %c0_1, %c0_2] : memref<8x8x4xf32, #tpu.memory_space<vmem>>, vector<8x8x1xf32>
    %c0_3 = arith.constant 0 : index
    %c0_4 = arith.constant 0 : index
    %4 = vector.load %arg3[%c0_3, %c0_4] : memref<4x128xf32, #tpu.memory_space<vmem>>, vector<1x128xf32>
    %5 = vector.shape_cast %4 : vector<1x128xf32> to vector<1x1x128xf32>
    %6 = vector.broadcast %3 : vector<8x8x1xf32> to vector<8x8x128xf32>
    %7 = vector.broadcast %5 : vector<1x1x128xf32> to vector<8x8x128xf32>
    %8 = arith.mulf %6, %7 : vector<8x8x128xf32>
    %c0_5 = arith.constant 0 : index
    %c0_6 = arith.constant 0 : index
    %9 = vector.load %arg4[%c0_5, %c0_6] : memref<1x128xf32, #tpu.memory_space<vmem>>, vector<1x128xf32>
    %10 = vector.shape_cast %9 : vector<1x128xf32> to vector<1x1x128xf32>
    %11 = vector.broadcast %10 : vector<1x1x128xf32> to vector<8x8x128xf32>
    %12 = arith.addf %8, %11 : vector<8x8x128xf32>
    %c0_7 = arith.constant 0 : index
    %c0_8 = arith.constant 0 : index
    %c1 = arith.constant 1 : index
    %13 = vector.load %arg2[%c0_7, %c0_8, %c1] : memref<8x8x4xf32, #tpu.memory_space<vmem>>, vector<8x8x1xf32>
    %c1_9 = arith.constant 1 : index
    %c0_10 = arith.constant 0 : index
    %14 = vector.load %arg3[%c1_9, %c0_10] : memref<4x128xf32, #tpu.memory_space<vmem>>, vector<1x128xf32>
    %15 = vector.shape_cast %14 : vector<1x128xf32> to vector<1x1x128xf32>
    %16 = vector.broadcast %13 : vector<8x8x1xf32> to vector<8x8x128xf32>
    %17 = vector.broadcast %15 : vector<1x1x128xf32> to vector<8x8x128xf32>
    %18 = arith.mulf %16, %17 : vector<8x8x128xf32>
    %19 = arith.addf %12, %18 : vector<8x8x128xf32>
    %c0_11 = arith.constant 0 : index
    %c0_12 = arith.constant 0 : index
    %c2 = arith.constant 2 : index
    %20 = vector.load %arg2[%c0_11, %c0_12, %c2] : memref<8x8x4xf32, #tpu.memory_space<vmem>>, vector<8x8x1xf32>
    %c2_13 = arith.constant 2 : index
    %c0_14 = arith.constant 0 : index
    %21 = vector.load %arg3[%c2_13, %c0_14] : memref<4x128xf32, #tpu.memory_space<vmem>>, vector<1x128xf32>
    %22 = vector.shape_cast %21 : vector<1x128xf32> to vector<1x1x128xf32>
    %23 = vector.broadcast %20 : vector<8x8x1xf32> to vector<8x8x128xf32>
    %24 = vector.broadcast %22 : vector<1x1x128xf32> to vector<8x8x128xf32>
    %25 = arith.mulf %23, %24 : vector<8x8x128xf32>
    %26 = arith.addf %19, %25 : vector<8x8x128xf32>
    %c0_15 = arith.constant 0 : index
    %c0_16 = arith.constant 0 : index
    %c3 = arith.constant 3 : index
    %27 = vector.load %arg2[%c0_15, %c0_16, %c3] : memref<8x8x4xf32, #tpu.memory_space<vmem>>, vector<8x8x1xf32>
    %c3_17 = arith.constant 3 : index
    %c0_18 = arith.constant 0 : index
    %28 = vector.load %arg3[%c3_17, %c0_18] : memref<4x128xf32, #tpu.memory_space<vmem>>, vector<1x128xf32>
    %29 = vector.shape_cast %28 : vector<1x128xf32> to vector<1x1x128xf32>
    %30 = vector.broadcast %27 : vector<8x8x1xf32> to vector<8x8x128xf32>
    %31 = vector.broadcast %29 : vector<1x1x128xf32> to vector<8x8x128xf32>
    %32 = arith.mulf %30, %31 : vector<8x8x128xf32>
    %33 = arith.addf %26, %32 : vector<8x8x128xf32>
    %c0_19 = arith.constant 0 : index
    %c0_20 = arith.constant 0 : index
    %34 = vector.load %arg5[%c0_19, %c0_20] : memref<128x128xf32, #tpu.memory_space<vmem>>, vector<128x128xf32>
    %c0_21 = arith.constant 0 : index
    %c0_22 = arith.constant 0 : index
    %35 = vector.load %arg9[%c0_21, %c0_22] : memref<8x128xf32, #tpu.memory_space<vmem>>, vector<8x128xf32>
    %cst = arith.constant dense<0.000000e+00> : vector<8x128xf32>
    %36 = tpu.matmul %35, %34, %cst {dimension_numbers = #tpu.dot_dimension_numbers<[1], [0], [0], [1], [0, 0, 1, 1], [], []>} : vector<8x128xf32>, vector<128x128xf32>, vector<8x128xf32> -> vector<8x128xf32>
    %37 = vector.extract_strided_slice %33 {offsets = [0, 0, 0], sizes = [1, 8, 128], strides = [1, 1, 1]} : vector<8x8x128xf32> to vector<1x8x128xf32>
    %38 = vector.shape_cast %37 : vector<1x8x128xf32> to vector<8x128xf32>
    %39 = arith.addf %38, %36 : vector<8x128xf32>
    %40 = math.tanh %39 : vector<8x128xf32>
    %cst_23 = arith.constant dense<0.000000e+00> : vector<8x128xf32>
    %41 = tpu.matmul %40, %34, %cst_23 {dimension_numbers = #tpu.dot_dimension_numbers<[1], [0], [0], [1], [0, 0, 1, 1], [], []>} : vector<8x128xf32>, vector<128x128xf32>, vector<8x128xf32> -> vector<8x128xf32>
    %42 = vector.extract_strided_slice %33 {offsets = [1, 0, 0], sizes = [1, 8, 128], strides = [1, 1, 1]} : vector<8x8x128xf32> to vector<1x8x128xf32>
    %43 = vector.shape_cast %42 : vector<1x8x128xf32> to vector<8x128xf32>
    %44 = arith.addf %43, %41 : vector<8x128xf32>
    %45 = math.tanh %44 : vector<8x128xf32>
    %cst_24 = arith.constant dense<0.000000e+00> : vector<8x128xf32>
    %46 = tpu.matmul %45, %34, %cst_24 {dimension_numbers = #tpu.dot_dimension_numbers<[1], [0], [0], [1], [0, 0, 1, 1], [], []>} : vector<8x128xf32>, vector<128x128xf32>, vector<8x128xf32> -> vector<8x128xf32>
    %47 = vector.extract_strided_slice %33 {offsets = [2, 0, 0], sizes = [1, 8, 128], strides = [1, 1, 1]} : vector<8x8x128xf32> to vector<1x8x128xf32>
    %48 = vector.shape_cast %47 : vector<1x8x128xf32> to vector<8x128xf32>
    %49 = arith.addf %48, %46 : vector<8x128xf32>
    %50 = math.tanh %49 : vector<8x128xf32>
    %cst_25 = arith.constant dense<0.000000e+00> : vector<8x128xf32>
    %51 = tpu.matmul %50, %34, %cst_25 {dimension_numbers = #tpu.dot_dimension_numbers<[1], [0], [0], [1], [0, 0, 1, 1], [], []>} : vector<8x128xf32>, vector<128x128xf32>, vector<8x128xf32> -> vector<8x128xf32>
    %52 = vector.extract_strided_slice %33 {offsets = [3, 0, 0], sizes = [1, 8, 128], strides = [1, 1, 1]} : vector<8x8x128xf32> to vector<1x8x128xf32>
    %53 = vector.shape_cast %52 : vector<1x8x128xf32> to vector<8x128xf32>
    %54 = arith.addf %53, %51 : vector<8x128xf32>
    %55 = math.tanh %54 : vector<8x128xf32>
    %cst_26 = arith.constant dense<0.000000e+00> : vector<8x128xf32>
    %56 = tpu.matmul %55, %34, %cst_26 {dimension_numbers = #tpu.dot_dimension_numbers<[1], [0], [0], [1], [0, 0, 1, 1], [], []>} : vector<8x128xf32>, vector<128x128xf32>, vector<8x128xf32> -> vector<8x128xf32>
    %57 = vector.extract_strided_slice %33 {offsets = [4, 0, 0], sizes = [1, 8, 128], strides = [1, 1, 1]} : vector<8x8x128xf32> to vector<1x8x128xf32>
    %58 = vector.shape_cast %57 : vector<1x8x128xf32> to vector<8x128xf32>
    %59 = arith.addf %58, %56 : vector<8x128xf32>
    %60 = math.tanh %59 : vector<8x128xf32>
    %cst_27 = arith.constant dense<0.000000e+00> : vector<8x128xf32>
    %61 = tpu.matmul %60, %34, %cst_27 {dimension_numbers = #tpu.dot_dimension_numbers<[1], [0], [0], [1], [0, 0, 1, 1], [], []>} : vector<8x128xf32>, vector<128x128xf32>, vector<8x128xf32> -> vector<8x128xf32>
    %62 = vector.extract_strided_slice %33 {offsets = [5, 0, 0], sizes = [1, 8, 128], strides = [1, 1, 1]} : vector<8x8x128xf32> to vector<1x8x128xf32>
    %63 = vector.shape_cast %62 : vector<1x8x128xf32> to vector<8x128xf32>
    %64 = arith.addf %63, %61 : vector<8x128xf32>
    %65 = math.tanh %64 : vector<8x128xf32>
    %cst_28 = arith.constant dense<0.000000e+00> : vector<8x128xf32>
    %66 = tpu.matmul %65, %34, %cst_28 {dimension_numbers = #tpu.dot_dimension_numbers<[1], [0], [0], [1], [0, 0, 1, 1], [], []>} : vector<8x128xf32>, vector<128x128xf32>, vector<8x128xf32> -> vector<8x128xf32>
    %67 = vector.extract_strided_slice %33 {offsets = [6, 0, 0], sizes = [1, 8, 128], strides = [1, 1, 1]} : vector<8x8x128xf32> to vector<1x8x128xf32>
    %68 = vector.shape_cast %67 : vector<1x8x128xf32> to vector<8x128xf32>
    %69 = arith.addf %68, %66 : vector<8x128xf32>
    %70 = math.tanh %69 : vector<8x128xf32>
    %cst_29 = arith.constant dense<0.000000e+00> : vector<8x128xf32>
    %71 = tpu.matmul %70, %34, %cst_29 {dimension_numbers = #tpu.dot_dimension_numbers<[1], [0], [0], [1], [0, 0, 1, 1], [], []>} : vector<8x128xf32>, vector<128x128xf32>, vector<8x128xf32> -> vector<8x128xf32>
    %72 = vector.extract_strided_slice %33 {offsets = [7, 0, 0], sizes = [1, 8, 128], strides = [1, 1, 1]} : vector<8x8x128xf32> to vector<1x8x128xf32>
    %73 = vector.shape_cast %72 : vector<1x8x128xf32> to vector<8x128xf32>
    %74 = arith.addf %73, %71 : vector<8x128xf32>
    %75 = math.tanh %74 : vector<8x128xf32>
    %c0_30 = arith.constant 0 : index
    %c0_31 = arith.constant 0 : index
    %76 = vector.load %arg9[%c0_30, %c0_31] : memref<8x128xf32, #tpu.memory_space<vmem>>, vector<8x128xf32>
    tpu.vector_store %arg9[%c0_30, %c0_31], %75 {strides = array<i32>} : memref<8x128xf32, #tpu.memory_space<vmem>>, vector<8x128xf32>,
    %c0_i32_32 = arith.constant 0 : i32
    %77 = arith.cmpi eq, %arg1, %c0_i32_32 : i32
    %78 = arith.extui %77 : i1 to i32
    %c0_i32_33 = arith.constant 0 : i32
    %79 = arith.cmpi ne, %78, %c0_i32_33 : i32
    scf.if %79 {
      %c0_34 = arith.constant 0 : index
      %c0_35 = arith.constant 0 : index
      %80 = vector.load %arg6[%c0_34, %c0_35] : memref<128x128xf32, #tpu.memory_space<vmem>>, vector<128x128xf32>
      %cst_36 = arith.constant dense<0.000000e+00> : vector<8x128xf32>
      %81 = tpu.matmul %75, %80, %cst_36 {dimension_numbers = #tpu.dot_dimension_numbers<[1], [0], [0], [1], [0, 0, 1, 1], [], []>} : vector<8x128xf32>, vector<128x128xf32>, vector<8x128xf32> -> vector<8x128xf32>
      %c0_37 = arith.constant 0 : index
      %c0_38 = arith.constant 0 : index
      %82 = vector.load %arg7[%c0_37, %c0_38] : memref<1x128xf32, #tpu.memory_space<vmem>>, vector<1x128xf32>
      %83 = vector.broadcast %82 : vector<1x128xf32> to vector<8x128xf32>
      %84 = arith.addf %81, %83 : vector<8x128xf32>
      %c0_39 = arith.constant 0 : index
      %c0_40 = arith.constant 0 : index
      %85 = vector.load %arg8[%c0_39, %c0_40] : memref<8x128xf32, #tpu.memory_space<vmem>>, vector<8x128xf32>
      tpu.vector_store %arg8[%c0_39, %c0_40], %84 {strides = array<i32>} : memref<8x128xf32, #tpu.memory_space<vmem>>, vector<8x128xf32>,
    } else {
    }
    return
  }
  func.func @transform_0(%arg0: i32, %arg1: i32) -> (i32, i32, i32) {
    %c0_i32 = arith.constant 0 : i32
    %c0_i32_0 = arith.constant 0 : i32
    return %arg1, %arg0, %c0_i32 : i32, i32, i32
  }
  func.func @transform_1(%arg0: i32, %arg1: i32) -> (i32, i32) {
    %c0_i32 = arith.constant 0 : i32
    %c0_i32_0 = arith.constant 0 : i32
    %c0_i32_1 = arith.constant 0 : i32
    return %c0_i32, %c0_i32_0 : i32, i32
  }
  func.func @transform_2(%arg0: i32, %arg1: i32) -> (i32, i32) {
    %c0_i32 = arith.constant 0 : i32
    %c0_i32_0 = arith.constant 0 : i32
    %c0_i32_1 = arith.constant 0 : i32
    return %c0_i32, %c0_i32_0 : i32, i32
  }
  func.func @transform_3(%arg0: i32, %arg1: i32) -> (i32, i32) {
    %c0_i32 = arith.constant 0 : i32
    %c0_i32_0 = arith.constant 0 : i32
    %c0_i32_1 = arith.constant 0 : i32
    return %c0_i32, %c0_i32_0 : i32, i32
  }
  func.func @transform_4(%arg0: i32, %arg1: i32) -> (i32, i32) {
    %c0_i32 = arith.constant 0 : i32
    %c0_i32_0 = arith.constant 0 : i32
    %c0_i32_1 = arith.constant 0 : i32
    return %c0_i32, %c0_i32_0 : i32, i32
  }
  func.func @transform_5(%arg0: i32, %arg1: i32) -> (i32, i32) {
    %c0_i32 = arith.constant 0 : i32
    %c0_i32_0 = arith.constant 0 : i32
    %c0_i32_1 = arith.constant 0 : i32
    return %c0_i32, %c0_i32_0 : i32, i32
  }
  func.func @transform_6(%arg0: i32, %arg1: i32) -> (i32, i32) {
    %c0_i32 = arith.constant 0 : i32
    %c0_i32_0 = arith.constant 0 : i32
    return %arg0, %c0_i32 : i32, i32
  }
}

</mosaic_0001>

<llo_original>
// kernel: rnn_model_forward.1
$region0: #{rnn_model_forward.1}
  #allocation0 [shape = 'u32[]', space=smem, size = 0x4, offset = 0x4, fixed_abs, tag = 'smem constant byte address 0x4 - core index']
  #allocation1 [shape = 'u32[144,128]{1,0:T(1,128)}', space=vmem, size = 0x12000, scoped, tag = 'internal scratch']
  #allocation2 [shape = 'f32[8,128]{1,0:T(8,128)}', space=vmem, size = 0x1000, scoped, tag = 'scratch operand']
  %s0 = inlined_call_operand.hbm [shape: f32[8,8,4], index: 0, kind: input, shape index: {}]
  %s1 = inlined_call_operand.hbm [shape: f32[4,128], index: 1, kind: input, shape index: {}]
  %s2 = inlined_call_operand.hbm [shape: f32[1,128], index: 2, kind: input, shape index: {}]
  %s3 = inlined_call_operand.hbm [shape: f32[128,128], index: 3, kind: input, shape index: {}]
  %s4 = inlined_call_operand.hbm [shape: f32[128,128], index: 4, kind: input, shape index: {}]
  %s5 = inlined_call_operand.hbm [shape: f32[1,128], index: 5, kind: input, shape index: {}]
  %s6 = inlined_call_operand.hbm [shape: f32[8,128], index: 6, kind: output, shape index: {}]
  %s7 = sld [smem:[#allocation0]]
  $region66: #{rnn_model_forward.1} parent=0
    _
  %s9 = ssub.s32 1, %s7
  %s10 = scalar_select 0, %s9, %s7
  $region1: #{rnn_model_forward.1} parent=0
    #allocation3 [shape = 'u8[32768]{0}', space=vmem, size = 0x8000, scoped, tag = 'input window, operand 0, single buffered']
    #allocation4 [shape = 's32[1]{0}', space=sflag, size = 0x4, scoped, tag = 'scoped memory for rnn_model_forward.1']
    #allocation5 [shape = 's32[1]{0}', space=sflag, size = 0x4, scoped, tag = 'scoped memory for rnn_model_forward.1']
    #allocation6 [shape = 'u8[2048]{0}', space=vmem, size = 0x800, scoped, tag = 'input window, operand 1, single buffered']
    #allocation7 [shape = 's32[1]{0}', space=sflag, size = 0x4, scoped, tag = 'scoped memory for rnn_model_forward.1']
    #allocation8 [shape = 'u8[512]{0}', space=vmem, size = 0x400, scoped, tag = 'input window, operand 2, single buffered']
    #allocation9 [shape = 'u8[65536]{0}', space=vmem, size = 0x10000, scoped, tag = 'input window, operand 3, single buffered']
    #allocation10 [shape = 's32[1]{0}', space=sflag, size = 0x4, scoped, tag = 'scoped memory for rnn_model_forward.1']
    #allocation11 [shape = 'u8[65536]{0}', space=vmem, size = 0x10000, scoped, tag = 'input window, operand 4, single buffered']
    #allocation12 [shape = 'u8[512]{0}', space=vmem, size = 0x400, scoped, tag = 'input window, operand 5, single buffered']
    #allocation13 [shape = 's32[1]{0}', space=sflag, size = 0x4, scoped, tag = 'scoped memory for rnn_model_forward.1']
    #allocation14 [shape = 'u8[4096]{0}', space=vmem, size = 0x1000, scoped, tag = 'output window, operand 0, single buffered']
    %11 = vsyncpa [#allocation4], 0
    %12 = vsyncpa [#allocation7], 0
    %13 = vsyncpa [#allocation10], 0
    %14 = vsyncpa [#allocation13], 0
    %15 = vsyncpa [#allocation5], 0
    // Predicated region
    $region2: #{rnn_model_forward.1} parent=1 // pred_check
      _
    $region3: #{rnn_model_forward.1} parent=1 // pred_check_branch
      %17 = sbr.rel (0) target = $region5
    $region4: #{rnn_model_forward.1} parent=1 // pred_region
      %s19 = ssub.s32 1024, 1024
      %20 = vsyncadd [#allocation4], %s19
      %s21 = sshll.u32 [#allocation3], 4
      %s22 = int_to_ptr.vmem [resolvable:$true] %s21
      %27 = dma.hbm_to_vmem [thread:$0]  %s0, 1024, %s22, [#allocation4], 128, 128, 8
    $region5: #{rnn_model_forward.1} parent=1 // pred_fallthru
      _
    // Predicated region
    $region6: #{rnn_model_forward.1} parent=1 // pred_check
      _
    $region7: #{rnn_model_forward.1} parent=1 // pred_check_branch
      %29 = sbr.rel (0) target = $region9
    $region8: #{rnn_model_forward.1} parent=1 // pred_region
      %s31 = ssub.s32 64, 64
      %32 = vsyncadd [#allocation7], %s31
      %s34 = sshll.u32 [#allocation6], 4
      %s35 = int_to_ptr.vmem [resolvable:$true] %s34
      %37 = dma.hbm_to_vmem [thread:$0]  %s1, 64, %s35, [#allocation7]
    $region9: #{rnn_model_forward.1} parent=1 // pred_fallthru
      _
    // Predicated region
    $region10: #{rnn_model_forward.1} parent=1 // pred_check
      _
    $region11: #{rnn_model_forward.1} parent=1 // pred_check_branch
      %39 = sbr.rel (0) target = $region13
    $region12: #{rnn_model_forward.1} parent=1 // pred_region
      %s41 = ssub.s32 16, 16
      %42 = vsyncadd [#allocation7], %s41
      %s44 = sshll.u32 [#allocation8], 4
      %s45 = int_to_ptr.vmem [resolvable:$true] %s44
      %47 = dma.hbm_to_vmem [thread:$0]  %s2, 16, %s45, [#allocation7]
    $region13: #{rnn_model_forward.1} parent=1 // pred_fallthru
      _
    // Predicated region
    $region14: #{rnn_model_forward.1} parent=1 // pred_check
      _
    $region15: #{rnn_model_forward.1} parent=1 // pred_check_branch
      %49 = sbr.rel (0) target = $region17
    $region16: #{rnn_model_forward.1} parent=1 // pred_region
      %s51 = ssub.s32 2048, 2048
      %52 = vsyncadd [#allocation10], %s51
      %s53 = sshll.u32 [#allocation9], 4
      %s54 = int_to_ptr.vmem [resolvable:$true] %s53
      %59 = dma.hbm_to_vmem [thread:$0]  %s3, 2048, %s54, [#allocation10], 128, 128, 8
    $region17: #{rnn_model_forward.1} parent=1 // pred_fallthru
      _
    // Predicated region
    $region18: #{rnn_model_forward.1} parent=1 // pred_check
      _
    $region19: #{rnn_model_forward.1} parent=1 // pred_check_branch
      %61 = sbr.rel (0) target = $region21
    $region20: #{rnn_model_forward.1} parent=1 // pred_region
      %s63 = ssub.s32 2048, 2048
      %64 = vsyncadd [#allocation10], %s63
      %s65 = sshll.u32 [#allocation11], 4
      %s66 = int_to_ptr.vmem [resolvable:$true] %s65
      %71 = dma.hbm_to_vmem [thread:$0]  %s4, 2048, %s66, [#allocation10], 128, 128, 8
    $region21: #{rnn_model_forward.1} parent=1 // pred_fallthru
      _
    // Predicated region
    $region22: #{rnn_model_forward.1} parent=1 // pred_check
      _
    $region23: #{rnn_model_forward.1} parent=1 // pred_check_branch
      %73 = sbr.rel (0) target = $region25
    $region24: #{rnn_model_forward.1} parent=1 // pred_region
      %s75 = ssub.s32 16, 16
      %76 = vsyncadd [#allocation13], %s75
      %s78 = sshll.u32 [#allocation12], 4
      %s79 = int_to_ptr.vmem [resolvable:$true] %s78
      %81 = dma.hbm_to_vmem [thread:$0]  %s5, 16, %s79, [#allocation13]
    $region25: #{rnn_model_forward.1} parent=1 // pred_fallthru
      _
    // Predicated region
    $region26: #{rnn_model_forward.1} parent=1 // pred_check
      _
    $region27: #{rnn_model_forward.1} parent=1 // pred_check_branch
      %83 = sbr.rel (0) target = $region29
    $region28: #{rnn_model_forward.1} parent=1 // pred_region
      %84 = dma.done [#allocation4], 1024
    $region29: #{rnn_model_forward.1} parent=1 // pred_fallthru
      _
    // Predicated region
    $region30: #{rnn_model_forward.1} parent=1 // pred_check
      _
    $region31: #{rnn_model_forward.1} parent=1 // pred_check_branch
      %86 = sbr.rel (0) target = $region33
    $region32: #{rnn_model_forward.1} parent=1 // pred_region
      %87 = dma.done [#allocation7], 64
    $region33: #{rnn_model_forward.1} parent=1 // pred_fallthru
      _
    // Predicated region
    $region34: #{rnn_model_forward.1} parent=1 // pred_check
      _
    $region35: #{rnn_model_forward.1} parent=1 // pred_check_branch
      %89 = sbr.rel (0) target = $region37
    $region36: #{rnn_model_forward.1} parent=1 // pred_region
      %90 = dma.done [#allocation7], 16
    $region37: #{rnn_model_forward.1} parent=1 // pred_fallthru
      _
    // Predicated region
    $region38: #{rnn_model_forward.1} parent=1 // pred_check
      _
    $region39: #{rnn_model_forward.1} parent=1 // pred_check_branch
      %92 = sbr.rel (0) target = $region41
    $region40: #{rnn_model_forward.1} parent=1 // pred_region
      %93 = dma.done [#allocation10], 2048
    $region41: #{rnn_model_forward.1} parent=1 // pred_fallthru
      _
    // Predicated region
    $region42: #{rnn_model_forward.1} parent=1 // pred_check
      _
    $region43: #{rnn_model_forward.1} parent=1 // pred_check_branch
      %95 = sbr.rel (0) target = $region45
    $region44: #{rnn_model_forward.1} parent=1 // pred_region
      %96 = dma.done [#allocation10], 2048
    $region45: #{rnn_model_forward.1} parent=1 // pred_fallthru
      _
    // Predicated region
    $region46: #{rnn_model_forward.1} parent=1 // pred_check
      _
    $region47: #{rnn_model_forward.1} parent=1 // pred_check_branch
      %98 = sbr.rel (0) target = $region49
    $region48: #{rnn_model_forward.1} parent=1 // pred_region
      %99 = dma.done [#allocation13], 16
    $region49: #{rnn_model_forward.1} parent=1 // pred_fallthru
      _
    %p100 = scmp.eq.s32.totalorder 0, 0
    // Predicated region
    $region50: #{rnn_model_forward.1} parent=1 // pred_check
      %p101 = pneg %p100
    $region51: #{rnn_model_forward.1} parent=1 // pred_check_branch
      %103 = sbr.rel (%p101) target = $region53
    $region52: #{rnn_model_forward.1} parent=1 // pred_region
      %104 = vst [vmem:[#allocation2] sm:$0xff] 0.0
    $region53: #{rnn_model_forward.1} parent=1 // pred_fallthru
      _
    %v105 = vld [vmem:[#allocation3] sm:$0xff]
    %v106 = vld [vmem:[#allocation3 + $0x8] sm:$0xff]
    %v107 = vld [vmem:[#allocation3 + $0x10] sm:$0xff]
    %v108 = vld [vmem:[#allocation3 + $0x18] sm:$0xff]
    %v109 = vld [vmem:[#allocation3 + $0x20] sm:$0xff]
    %v110 = vld [vmem:[#allocation3 + $0x28] sm:$0xff]
    %v111 = vld [vmem:[#allocation3 + $0x30] sm:$0xff]
    %v112 = vld [vmem:[#allocation3 + $0x38] sm:$0xff]
    %v113 = vld [vmem:[#allocation6] sm:$0x1]
    %115 = vset.pattern.permute.xlu0 0
    %116 = vperm.xlu0 %115, %v105
    %v117 = vpop.permute.xlu0 %116
    %120 = vset.pattern.permute.xlu0 0
    %121 = vperm.xlu0 %120, %v106
    %v122 = vpop.permute.xlu0 %121
    %125 = vset.pattern.permute.xlu0 0
    %126 = vperm.xlu0 %125, %v107
    %v127 = vpop.permute.xlu0 %126
    %130 = vset.pattern.permute.xlu0 0
    %131 = vperm.xlu0 %130, %v108
    %v132 = vpop.permute.xlu0 %131
    %135 = vset.pattern.permute.xlu0 0
    %136 = vperm.xlu0 %135, %v109
    %v137 = vpop.permute.xlu0 %136
    %140 = vset.pattern.permute.xlu0 0
    %141 = vperm.xlu0 %140, %v110
    %v142 = vpop.permute.xlu0 %141
    %145 = vset.pattern.permute.xlu0 0
    %146 = vperm.xlu0 %145, %v111
    %v147 = vpop.permute.xlu0 %146
    %150 = vset.pattern.permute.xlu0 0
    %151 = vperm.xlu0 %150, %v112
    %v152 = vpop.permute.xlu0 %151
    %v154 = vlaneseq
    %v155 = vshrl.u32 %v154, 7
    %v156 = vsub.s32 0, %v155
    %v157 = vrot.slane %v113, %v156
    %v158 = vmul.f32 %v117, %v157
    %v159 = vmul.f32 %v122, %v157
    %v160 = vmul.f32 %v127, %v157
    %v161 = vmul.f32 %v132, %v157
    %v162 = vmul.f32 %v137, %v157
    %v163 = vmul.f32 %v142, %v157
    %v164 = vmul.f32 %v147, %v157
    %v165 = vmul.f32 %v152, %v157
    %v166 = vld [vmem:[#allocation8] sm:$0x1]
    %v168 = vlaneseq
    %v169 = vshrl.u32 %v168, 7
    %v170 = vsub.s32 0, %v169
    %v171 = vrot.slane %v166, %v170
    %v173 = vadd.f32 %v158, %v171
    %v174 = vadd.f32 %v159, %v171
    %v175 = vadd.f32 %v160, %v171
    %v176 = vadd.f32 %v161, %v171
    %v177 = vadd.f32 %v162, %v171
    %v178 = vadd.f32 %v163, %v171
    %v179 = vadd.f32 %v164, %v171
    %v180 = vadd.f32 %v165, %v171
    %v181 = vld [vmem:[#allocation6 + $0x1] sm:$0x1]
    %182 = vset.pattern.permute.xlu0 1
    %183 = vperm.xlu0 %182, %v105
    %v184 = vpop.permute.xlu0 %183
    %186 = vset.pattern.permute.xlu0 1
    %187 = vperm.xlu0 %186, %v106
    %v188 = vpop.permute.xlu0 %187
    %190 = vset.pattern.permute.xlu0 1
    %191 = vperm.xlu0 %190, %v107
    %v192 = vpop.permute.xlu0 %191
    %194 = vset.pattern.permute.xlu0 1
    %195 = vperm.xlu0 %194, %v108
    %v196 = vpop.permute.xlu0 %195
    %198 = vset.pattern.permute.xlu0 1
    %199 = vperm.xlu0 %198, %v109
    %v200 = vpop.permute.xlu0 %199
    %202 = vset.pattern.permute.xlu0 1
    %203 = vperm.xlu0 %202, %v110
    %v204 = vpop.permute.xlu0 %203
    %206 = vset.pattern.permute.xlu0 1
    %207 = vperm.xlu0 %206, %v111
    %v208 = vpop.permute.xlu0 %207
    %210 = vset.pattern.permute.xlu0 1
    %211 = vperm.xlu0 %210, %v112
    %v212 = vpop.permute.xlu0 %211
    %v214 = vlaneseq
    %v215 = vshrl.u32 %v214, 7
    %v216 = vsub.s32 0, %v215
    %v217 = vrot.slane %v181, %v216
    %v218 = vmul.f32 %v184, %v217
    %v219 = vmul.f32 %v188, %v217
    %v220 = vmul.f32 %v192, %v217
    %v221 = vmul.f32 %v196, %v217
    %v222 = vmul.f32 %v200, %v217
    %v223 = vmul.f32 %v204, %v217
    %v224 = vmul.f32 %v208, %v217
    %v225 = vmul.f32 %v212, %v217
    %v226 = vadd.f32 %v173, %v218
    %v227 = vadd.f32 %v174, %v219
    %v228 = vadd.f32 %v175, %v220
    %v229 = vadd.f32 %v176, %v221
    %v230 = vadd.f32 %v177, %v222
    %v231 = vadd.f32 %v178, %v223
    %v232 = vadd.f32 %v179, %v224
    %v233 = vadd.f32 %v180, %v225
    %v234 = vld [vmem:[#allocation6 + $0x2] sm:$0x1]
    %235 = vset.pattern.permute.xlu0 2
    %236 = vperm.xlu0 %235, %v105
    %v237 = vpop.permute.xlu0 %236
    %239 = vset.pattern.permute.xlu0 2
    %240 = vperm.xlu0 %239, %v106
    %v241 = vpop.permute.xlu0 %240
    %243 = vset.pattern.permute.xlu0 2
    %244 = vperm.xlu0 %243, %v107
    %v245 = vpop.permute.xlu0 %244
    %247 = vset.pattern.permute.xlu0 2
    %248 = vperm.xlu0 %247, %v108
    %v249 = vpop.permute.xlu0 %248
    %251 = vset.pattern.permute.xlu0 2
    %252 = vperm.xlu0 %251, %v109
    %v253 = vpop.permute.xlu0 %252
    %255 = vset.pattern.permute.xlu0 2
    %256 = vperm.xlu0 %255, %v110
    %v257 = vpop.permute.xlu0 %256
    %259 = vset.pattern.permute.xlu0 2
    %260 = vperm.xlu0 %259, %v111
    %v261 = vpop.permute.xlu0 %260
    %263 = vset.pattern.permute.xlu0 2
    %264 = vperm.xlu0 %263, %v112
    %v265 = vpop.permute.xlu0 %264
    %v267 = vlaneseq
    %v268 = vshrl.u32 %v267, 7
    %v269 = vsub.s32 0, %v268
    %v270 = vrot.slane %v234, %v269
    %v271 = vmul.f32 %v237, %v270
    %v272 = vmul.f32 %v241, %v270
    %v273 = vmul.f32 %v245, %v270
    %v274 = vmul.f32 %v249, %v270
    %v275 = vmul.f32 %v253, %v270
    %v276 = vmul.f32 %v257, %v270
    %v277 = vmul.f32 %v261, %v270
    %v278 = vmul.f32 %v265, %v270
    %v279 = vadd.f32 %v226, %v271
    %v280 = vadd.f32 %v227, %v272
    %v281 = vadd.f32 %v228, %v273
    %v282 = vadd.f32 %v229, %v274
    %v283 = vadd.f32 %v230, %v275
    %v284 = vadd.f32 %v231, %v276
    %v285 = vadd.f32 %v232, %v277
    %v286 = vadd.f32 %v233, %v278
    %v287 = vld [vmem:[#allocation6 + $0x3] sm:$0x1]
    %288 = vset.pattern.permute.xlu0 3
    %289 = vperm.xlu0 %288, %v105
    %v290 = vpop.permute.xlu0 %289
    %292 = vset.pattern.permute.xlu0 3
    %293 = vperm.xlu0 %292, %v106
    %v294 = vpop.permute.xlu0 %293
    %296 = vset.pattern.permute.xlu0 3
    %297 = vperm.xlu0 %296, %v107
    %v298 = vpop.permute.xlu0 %297
    %300 = vset.pattern.permute.xlu0 3
    %301 = vperm.xlu0 %300, %v108
    %v302 = vpop.permute.xlu0 %301
    %304 = vset.pattern.permute.xlu0 3
    %305 = vperm.xlu0 %304, %v109
    %v306 = vpop.permute.xlu0 %305
    %308 = vset.pattern.permute.xlu0 3
    %309 = vperm.xlu0 %308, %v110
    %v310 = vpop.permute.xlu0 %309
    %312 = vset.pattern.permute.xlu0 3
    %313 = vperm.xlu0 %312, %v111
    %v314 = vpop.permute.xlu0 %313
    %316 = vset.pattern.permute.xlu0 3
    %317 = vperm.xlu0 %316, %v112
    %v318 = vpop.permute.xlu0 %317
    %v320 = vlaneseq
    %v321 = vshrl.u32 %v320, 7
    %v322 = vsub.s32 0, %v321
    %v323 = vrot.slane %v287, %v322
    %v324 = vmul.f32 %v290, %v323
    %v325 = vmul.f32 %v294, %v323
    %v326 = vmul.f32 %v298, %v323
    %v327 = vmul.f32 %v302, %v323
    %v328 = vmul.f32 %v306, %v323
    %v329 = vmul.f32 %v310, %v323
    %v330 = vmul.f32 %v314, %v323
    %v331 = vmul.f32 %v318, %v323
    %v332 = vadd.f32 %v279, %v324
    %v333 = vadd.f32 %v280, %v325
    %v334 = vadd.f32 %v281, %v326
    %v335 = vadd.f32 %v282, %v327
    %v336 = vadd.f32 %v283, %v328
    %v337 = vadd.f32 %v284, %v329
    %v338 = vadd.f32 %v285, %v330
    %v339 = vadd.f32 %v286, %v331
    %v340 = vld [vmem:[#allocation9] sm:$0xff]
    %v341 = vld [vmem:[#allocation9 + $0x8] sm:$0xff]
    %v342 = vld [vmem:[#allocation9 + $0x10] sm:$0xff]
    %v343 = vld [vmem:[#allocation9 + $0x18] sm:$0xff]
    %v344 = vld [vmem:[#allocation9 + $0x20] sm:$0xff]
    %v345 = vld [vmem:[#allocation9 + $0x28] sm:$0xff]
    %v346 = vld [vmem:[#allocation9 + $0x30] sm:$0xff]
    %v347 = vld [vmem:[#allocation9 + $0x38] sm:$0xff]
    %v348 = vld [vmem:[#allocation9 + $0x40] sm:$0xff]
    %v349 = vld [vmem:[#allocation9 + $0x48] sm:$0xff]
    %v350 = vld [vmem:[#allocation9 + $0x50] sm:$0xff]
    %v351 = vld [vmem:[#allocation9 + $0x58] sm:$0xff]
    %v352 = vld [vmem:[#allocation9 + $0x60] sm:$0xff]
    %v353 = vld [vmem:[#allocation9 + $0x68] sm:$0xff]
    %v354 = vld [vmem:[#allocation9 + $0x70] sm:$0xff]
    %v355 = vld [vmem:[#allocation9 + $0x78] sm:$0xff]
    %v356 = vld [vmem:[#allocation2] sm:$0xff]
    %357 = vmatprep.subr.mxu0 0.0
    %358 = vmatpush1.msra.mxu0 %v340
    %359 = vmatprep.subr.mxu0 0.0
    %360 = vmatpush1.msra.mxu0 %v341
    %361 = vmatprep.subr.mxu0 0.0
    %362 = vmatpush1.msra.mxu0 %v342
    %363 = vmatprep.subr.mxu0 0.0
    %364 = vmatpush1.msra.mxu0 %v343
    %365 = vmatprep.subr.mxu0 0.0
    %366 = vmatpush1.msra.mxu0 %v344
    %367 = vmatprep.subr.mxu0 0.0
    %368 = vmatpush1.msra.mxu0 %v345
    %369 = vmatprep.subr.mxu0 0.0
    %370 = vmatpush1.msra.mxu0 %v346
    %371 = vmatprep.subr.mxu0 0.0
    %372 = vmatpush1.msra.mxu0 %v347
    %373 = vmatprep.subr.mxu0 0.0
    %374 = vmatpush1.msra.mxu0 %v348
    %375 = vmatprep.subr.mxu0 0.0
    %376 = vmatpush1.msra.mxu0 %v349
    %377 = vmatprep.subr.mxu0 0.0
    %378 = vmatpush1.msra.mxu0 %v350
    %379 = vmatprep.subr.mxu0 0.0
    %380 = vmatpush1.msra.mxu0 %v351
    %381 = vmatprep.subr.mxu0 0.0
    %382 = vmatpush1.msra.mxu0 %v352
    %383 = vmatprep.subr.mxu0 0.0
    %384 = vmatpush1.msra.mxu0 %v353
    %385 = vmatprep.subr.mxu0 0.0
    %386 = vmatpush1.msra.mxu0 %v354
    %387 = vmatprep.subr.mxu0 0.0
    %388 = vmatpush1.msra.mxu0 %v355
    %389 = vmatprep.subr.mxu0 0.0
    %390 = vmatpush1.msra.mxu0 0.0
    %391 = vmatprep.subr.mxu0 0.0
    %392 = vmatpush1.msra.mxu0 0.0
    %393 = vmatprep.subr.mxu0 0.0
    %394 = vmatpush1.msra.mxu0 0.0
    %395 = vmatprep.subr.mxu0 0.0
    %396 = vmatpush1.msra.mxu0 0.0
    %397 = vmatprep.subr.mxu0 0.0
    %398 = vmatpush1.msra.mxu0 0.0
    %399 = vmatprep.subr.mxu0 0.0
    %400 = vmatpush1.msra.mxu0 0.0
    %401 = vmatprep.subr.mxu0 0.0
    %402 = vmatpush1.msra.mxu0 0.0
    %403 = vmatprep.subr.mxu0 0.0
    %404 = vmatpush1.msra.mxu0 0.0
    %405 = vmatprep.subr.mxu0 0.0
    %406 = vmatpush1.msra.mxu0 0.0
    %407 = vmatprep.subr.mxu0 0.0
    %408 = vmatpush1.msra.mxu0 0.0
    %409 = vmatprep.subr.mxu0 0.0
    %410 = vmatpush1.msra.mxu0 0.0
    %411 = vmatprep.subr.mxu0 0.0
    %412 = vmatpush1.msra.mxu0 0.0
    %413 = vmatprep.subr.mxu0 0.0
    %414 = vmatpush1.msra.mxu0 0.0
    %415 = vmatprep.subr.mxu0 0.0
    %416 = vmatpush1.msra.mxu0 0.0
    %417 = vmatprep.subr.mxu0 0.0
    %418 = vmatpush1.msra.mxu0 0.0
    %419 = vmatprep.subr.mxu0 0.0
    %420 = vmatpush1.msra.mxu0 0.0
    %421 = vmatprep.mubr.f32.mxu0 0.0
    %422 = vmatmul.mubr.f32.gmra.mrb[0].mxu0 %v356
    %v423 = vpop.f32.mrb[0].mxu0
    %v424 = vadd.f32 0.0, %v423
    %v425 = vpop.f32.mrb[0].mxu0
    %426 = vdwg.mxu0
    %v427 = vadd.f32 %v332, %v424
    %v428 = vtanh.pop %v427
    %429 = vmatprep.subr.mxu0 0.0
    %430 = vmatpush1.msra.mxu0 %v340
    %431 = vmatprep.subr.mxu0 0.0
    %432 = vmatpush1.msra.mxu0 %v341
    %433 = vmatprep.subr.mxu0 0.0
    %434 = vmatpush1.msra.mxu0 %v342
    %435 = vmatprep.subr.mxu0 0.0
    %436 = vmatpush1.msra.mxu0 %v343
    %437 = vmatprep.subr.mxu0 0.0
    %438 = vmatpush1.msra.mxu0 %v344
    %439 = vmatprep.subr.mxu0 0.0
    %440 = vmatpush1.msra.mxu0 %v345
    %441 = vmatprep.subr.mxu0 0.0
    %442 = vmatpush1.msra.mxu0 %v346
    %443 = vmatprep.subr.mxu0 0.0
    %444 = vmatpush1.msra.mxu0 %v347
    %445 = vmatprep.subr.mxu0 0.0
    %446 = vmatpush1.msra.mxu0 %v348
    %447 = vmatprep.subr.mxu0 0.0
    %448 = vmatpush1.msra.mxu0 %v349
    %449 = vmatprep.subr.mxu0 0.0
    %450 = vmatpush1.msra.mxu0 %v350
    %451 = vmatprep.subr.mxu0 0.0
    %452 = vmatpush1.msra.mxu0 %v351
    %453 = vmatprep.subr.mxu0 0.0
    %454 = vmatpush1.msra.mxu0 %v352
    %455 = vmatprep.subr.mxu0 0.0
    %456 = vmatpush1.msra.mxu0 %v353
    %457 = vmatprep.subr.mxu0 0.0
    %458 = vmatpush1.msra.mxu0 %v354
    %459 = vmatprep.subr.mxu0 0.0
    %460 = vmatpush1.msra.mxu0 %v355
    %461 = vmatprep.subr.mxu0 0.0
    %462 = vmatpush1.msra.mxu0 0.0
    %463 = vmatprep.subr.mxu0 0.0
    %464 = vmatpush1.msra.mxu0 0.0
    %465 = vmatprep.subr.mxu0 0.0
    %466 = vmatpush1.msra.mxu0 0.0
    %467 = vmatprep.subr.mxu0 0.0
    %468 = vmatpush1.msra.mxu0 0.0
    %469 = vmatprep.subr.mxu0 0.0
    %470 = vmatpush1.msra.mxu0 0.0
    %471 = vmatprep.subr.mxu0 0.0
    %472 = vmatpush1.msra.mxu0 0.0
    %473 = vmatprep.subr.mxu0 0.0
    %474 = vmatpush1.msra.mxu0 0.0
    %475 = vmatprep.subr.mxu0 0.0
    %476 = vmatpush1.msra.mxu0 0.0
    %477 = vmatprep.subr.mxu0 0.0
    %478 = vmatpush1.msra.mxu0 0.0
    %479 = vmatprep.subr.mxu0 0.0
    %480 = vmatpush1.msra.mxu0 0.0
    %481 = vmatprep.subr.mxu0 0.0
    %482 = vmatpush1.msra.mxu0 0.0
    %483 = vmatprep.subr.mxu0 0.0
    %484 = vmatpush1.msra.mxu0 0.0
    %485 = vmatprep.subr.mxu0 0.0
    %486 = vmatpush1.msra.mxu0 0.0
    %487 = vmatprep.subr.mxu0 0.0
    %488 = vmatpush1.msra.mxu0 0.0
    %489 = vmatprep.subr.mxu0 0.0
    %490 = vmatpush1.msra.mxu0 0.0
    %491 = vmatprep.subr.mxu0 0.0
    %492 = vmatpush1.msra.mxu0 0.0
    %493 = vmatprep.mubr.f32.mxu0 0.0
    %494 = vmatmul.mubr.f32.gmra.mrb[0].mxu0 %v428
    %v495 = vpop.f32.mrb[0].mxu0
    %v496 = vadd.f32 0.0, %v495
    %v497 = vpop.f32.mrb[0].mxu0
    %498 = vdwg.mxu0
    %v499 = vadd.f32 %v333, %v496
    %v500 = vtanh.pop %v499
    %501 = vmatprep.subr.mxu0 0.0
    %502 = vmatpush1.msra.mxu0 %v340
    %503 = vmatprep.subr.mxu0 0.0
    %504 = vmatpush1.msra.mxu0 %v341
    %505 = vmatprep.subr.mxu0 0.0
    %506 = vmatpush1.msra.mxu0 %v342
    %507 = vmatprep.subr.mxu0 0.0
    %508 = vmatpush1.msra.mxu0 %v343
    %509 = vmatprep.subr.mxu0 0.0
    %510 = vmatpush1.msra.mxu0 %v344
    %511 = vmatprep.subr.mxu0 0.0
    %512 = vmatpush1.msra.mxu0 %v345
    %513 = vmatprep.subr.mxu0 0.0
    %514 = vmatpush1.msra.mxu0 %v346
    %515 = vmatprep.subr.mxu0 0.0
    %516 = vmatpush1.msra.mxu0 %v347
    %517 = vmatprep.subr.mxu0 0.0
    %518 = vmatpush1.msra.mxu0 %v348
    %519 = vmatprep.subr.mxu0 0.0
    %520 = vmatpush1.msra.mxu0 %v349
    %521 = vmatprep.subr.mxu0 0.0
    %522 = vmatpush1.msra.mxu0 %v350
    %523 = vmatprep.subr.mxu0 0.0
    %524 = vmatpush1.msra.mxu0 %v351
    %525 = vmatprep.subr.mxu0 0.0
    %526 = vmatpush1.msra.mxu0 %v352
    %527 = vmatprep.subr.mxu0 0.0
    %528 = vmatpush1.msra.mxu0 %v353
    %529 = vmatprep.subr.mxu0 0.0
    %530 = vmatpush1.msra.mxu0 %v354
    %531 = vmatprep.subr.mxu0 0.0
    %532 = vmatpush1.msra.mxu0 %v355
    %533 = vmatprep.subr.mxu0 0.0
    %534 = vmatpush1.msra.mxu0 0.0
    %535 = vmatprep.subr.mxu0 0.0
    %536 = vmatpush1.msra.mxu0 0.0
    %537 = vmatprep.subr.mxu0 0.0
    %538 = vmatpush1.msra.mxu0 0.0
    %539 = vmatprep.subr.mxu0 0.0
    %540 = vmatpush1.msra.mxu0 0.0
    %541 = vmatprep.subr.mxu0 0.0
    %542 = vmatpush1.msra.mxu0 0.0
    %543 = vmatprep.subr.mxu0 0.0
    %544 = vmatpush1.msra.mxu0 0.0
    %545 = vmatprep.subr.mxu0 0.0
    %546 = vmatpush1.msra.mxu0 0.0
    %547 = vmatprep.subr.mxu0 0.0
    %548 = vmatpush1.msra.mxu0 0.0
    %549 = vmatprep.subr.mxu0 0.0
    %550 = vmatpush1.msra.mxu0 0.0
    %551 = vmatprep.subr.mxu0 0.0
    %552 = vmatpush1.msra.mxu0 0.0
    %553 = vmatprep.subr.mxu0 0.0
    %554 = vmatpush1.msra.mxu0 0.0
    %555 = vmatprep.subr.mxu0 0.0
    %556 = vmatpush1.msra.mxu0 0.0
    %557 = vmatprep.subr.mxu0 0.0
    %558 = vmatpush1.msra.mxu0 0.0
    %559 = vmatprep.subr.mxu0 0.0
    %560 = vmatpush1.msra.mxu0 0.0
    %561 = vmatprep.subr.mxu0 0.0
    %562 = vmatpush1.msra.mxu0 0.0
    %563 = vmatprep.subr.mxu0 0.0
    %564 = vmatpush1.msra.mxu0 0.0
    %565 = vmatprep.mubr.f32.mxu0 0.0
    %566 = vmatmul.mubr.f32.gmra.mrb[0].mxu0 %v500
    %v567 = vpop.f32.mrb[0].mxu0
    %v568 = vadd.f32 0.0, %v567
    %v569 = vpop.f32.mrb[0].mxu0
    %570 = vdwg.mxu0
    %v571 = vadd.f32 %v334, %v568
    %v572 = vtanh.pop %v571
    %573 = vmatprep.subr.mxu0 0.0
    %574 = vmatpush1.msra.mxu0 %v340
    %575 = vmatprep.subr.mxu0 0.0
    %576 = vmatpush1.msra.mxu0 %v341
    %577 = vmatprep.subr.mxu0 0.0
    %578 = vmatpush1.msra.mxu0 %v342
    %579 = vmatprep.subr.mxu0 0.0
    %580 = vmatpush1.msra.mxu0 %v343
    %581 = vmatprep.subr.mxu0 0.0
    %582 = vmatpush1.msra.mxu0 %v344
    %583 = vmatprep.subr.mxu0 0.0
    %584 = vmatpush1.msra.mxu0 %v345
    %585 = vmatprep.subr.mxu0 0.0
    %586 = vmatpush1.msra.mxu0 %v346
    %587 = vmatprep.subr.mxu0 0.0
    %588 = vmatpush1.msra.mxu0 %v347
    %589 = vmatprep.subr.mxu0 0.0
    %590 = vmatpush1.msra.mxu0 %v348
    %591 = vmatprep.subr.mxu0 0.0
    %592 = vmatpush1.msra.mxu0 %v349
    %593 = vmatprep.subr.mxu0 0.0
    %594 = vmatpush1.msra.mxu0 %v350
    %595 = vmatprep.subr.mxu0 0.0
    %596 = vmatpush1.msra.mxu0 %v351
    %597 = vmatprep.subr.mxu0 0.0
    %598 = vmatpush1.msra.mxu0 %v352
    %599 = vmatprep.subr.mxu0 0.0
    %600 = vmatpush1.msra.mxu0 %v353
    %601 = vmatprep.subr.mxu0 0.0
    %602 = vmatpush1.msra.mxu0 %v354
    %603 = vmatprep.subr.mxu0 0.0
    %604 = vmatpush1.msra.mxu0 %v355
    %605 = vmatprep.subr.mxu0 0.0
    %606 = vmatpush1.msra.mxu0 0.0
    %607 = vmatprep.subr.mxu0 0.0
    %608 = vmatpush1.msra.mxu0 0.0
    %609 = vmatprep.subr.mxu0 0.0
    %610 = vmatpush1.msra.mxu0 0.0
    %611 = vmatprep.subr.mxu0 0.0
    %612 = vmatpush1.msra.mxu0 0.0
    %613 = vmatprep.subr.mxu0 0.0
    %614 = vmatpush1.msra.mxu0 0.0
    %615 = vmatprep.subr.mxu0 0.0
    %616 = vmatpush1.msra.mxu0 0.0
    %617 = vmatprep.subr.mxu0 0.0
    %618 = vmatpush1.msra.mxu0 0.0
    %619 = vmatprep.subr.mxu0 0.0
    %620 = vmatpush1.msra.mxu0 0.0
    %621 = vmatprep.subr.mxu0 0.0
    %622 = vmatpush1.msra.mxu0 0.0
    %623 = vmatprep.subr.mxu0 0.0
    %624 = vmatpush1.msra.mxu0 0.0
    %625 = vmatprep.subr.mxu0 0.0
    %626 = vmatpush1.msra.mxu0 0.0
    %627 = vmatprep.subr.mxu0 0.0
    %628 = vmatpush1.msra.mxu0 0.0
    %629 = vmatprep.subr.mxu0 0.0
    %630 = vmatpush1.msra.mxu0 0.0
    %631 = vmatprep.subr.mxu0 0.0
    %632 = vmatpush1.msra.mxu0 0.0
    %633 = vmatprep.subr.mxu0 0.0
    %634 = vmatpush1.msra.mxu0 0.0
    %635 = vmatprep.subr.mxu0 0.0
    %636 = vmatpush1.msra.mxu0 0.0
    %637 = vmatprep.mubr.f32.mxu0 0.0
    %638 = vmatmul.mubr.f32.gmra.mrb[0].mxu0 %v572
    %v639 = vpop.f32.mrb[0].mxu0
    %v640 = vadd.f32 0.0, %v639
    %v641 = vpop.f32.mrb[0].mxu0
    %642 = vdwg.mxu0
    %v643 = vadd.f32 %v335, %v640
    %v644 = vtanh.pop %v643
    %645 = vmatprep.subr.mxu0 0.0
    %646 = vmatpush1.msra.mxu0 %v340
    %647 = vmatprep.subr.mxu0 0.0
    %648 = vmatpush1.msra.mxu0 %v341
    %649 = vmatprep.subr.mxu0 0.0
    %650 = vmatpush1.msra.mxu0 %v342
    %651 = vmatprep.subr.mxu0 0.0
    %652 = vmatpush1.msra.mxu0 %v343
    %653 = vmatprep.subr.mxu0 0.0
    %654 = vmatpush1.msra.mxu0 %v344
    %655 = vmatprep.subr.mxu0 0.0
    %656 = vmatpush1.msra.mxu0 %v345
    %657 = vmatprep.subr.mxu0 0.0
    %658 = vmatpush1.msra.mxu0 %v346
    %659 = vmatprep.subr.mxu0 0.0
    %660 = vmatpush1.msra.mxu0 %v347
    %661 = vmatprep.subr.mxu0 0.0
    %662 = vmatpush1.msra.mxu0 %v348
    %663 = vmatprep.subr.mxu0 0.0
    %664 = vmatpush1.msra.mxu0 %v349
    %665 = vmatprep.subr.mxu0 0.0
    %666 = vmatpush1.msra.mxu0 %v350
    %667 = vmatprep.subr.mxu0 0.0
    %668 = vmatpush1.msra.mxu0 %v351
    %669 = vmatprep.subr.mxu0 0.0
    %670 = vmatpush1.msra.mxu0 %v352
    %671 = vmatprep.subr.mxu0 0.0
    %672 = vmatpush1.msra.mxu0 %v353
    %673 = vmatprep.subr.mxu0 0.0
    %674 = vmatpush1.msra.mxu0 %v354
    %675 = vmatprep.subr.mxu0 0.0
    %676 = vmatpush1.msra.mxu0 %v355
    %677 = vmatprep.subr.mxu0 0.0
    %678 = vmatpush1.msra.mxu0 0.0
    %679 = vmatprep.subr.mxu0 0.0
    %680 = vmatpush1.msra.mxu0 0.0
    %681 = vmatprep.subr.mxu0 0.0
    %682 = vmatpush1.msra.mxu0 0.0
    %683 = vmatprep.subr.mxu0 0.0
    %684 = vmatpush1.msra.mxu0 0.0
    %685 = vmatprep.subr.mxu0 0.0
    %686 = vmatpush1.msra.mxu0 0.0
    %687 = vmatprep.subr.mxu0 0.0
    %688 = vmatpush1.msra.mxu0 0.0
    %689 = vmatprep.subr.mxu0 0.0
    %690 = vmatpush1.msra.mxu0 0.0
    %691 = vmatprep.subr.mxu0 0.0
    %692 = vmatpush1.msra.mxu0 0.0
    %693 = vmatprep.subr.mxu0 0.0
    %694 = vmatpush1.msra.mxu0 0.0
    %695 = vmatprep.subr.mxu0 0.0
    %696 = vmatpush1.msra.mxu0 0.0
    %697 = vmatprep.subr.mxu0 0.0
    %698 = vmatpush1.msra.mxu0 0.0
    %699 = vmatprep.subr.mxu0 0.0
    %700 = vmatpush1.msra.mxu0 0.0
    %701 = vmatprep.subr.mxu0 0.0
    %702 = vmatpush1.msra.mxu0 0.0
    %703 = vmatprep.subr.mxu0 0.0
    %704 = vmatpush1.msra.mxu0 0.0
    %705 = vmatprep.subr.mxu0 0.0
    %706 = vmatpush1.msra.mxu0 0.0
    %707 = vmatprep.subr.mxu0 0.0
    %708 = vmatpush1.msra.mxu0 0.0
    %709 = vmatprep.mubr.f32.mxu0 0.0
    %710 = vmatmul.mubr.f32.gmra.mrb[0].mxu0 %v644
    %v711 = vpop.f32.mrb[0].mxu0
    %v712 = vadd.f32 0.0, %v711
    %v713 = vpop.f32.mrb[0].mxu0
    %714 = vdwg.mxu0
    %v715 = vadd.f32 %v336, %v712
    %v716 = vtanh.pop %v715
    %717 = vmatprep.subr.mxu0 0.0
    %718 = vmatpush1.msra.mxu0 %v340
    %719 = vmatprep.subr.mxu0 0.0
    %720 = vmatpush1.msra.mxu0 %v341
    %721 = vmatprep.subr.mxu0 0.0
    %722 = vmatpush1.msra.mxu0 %v342
    %723 = vmatprep.subr.mxu0 0.0
    %724 = vmatpush1.msra.mxu0 %v343
    %725 = vmatprep.subr.mxu0 0.0
    %726 = vmatpush1.msra.mxu0 %v344
    %727 = vmatprep.subr.mxu0 0.0
    %728 = vmatpush1.msra.mxu0 %v345
    %729 = vmatprep.subr.mxu0 0.0
    %730 = vmatpush1.msra.mxu0 %v346
    %731 = vmatprep.subr.mxu0 0.0
    %732 = vmatpush1.msra.mxu0 %v347
    %733 = vmatprep.subr.mxu0 0.0
    %734 = vmatpush1.msra.mxu0 %v348
    %735 = vmatprep.subr.mxu0 0.0
    %736 = vmatpush1.msra.mxu0 %v349
    %737 = vmatprep.subr.mxu0 0.0
    %738 = vmatpush1.msra.mxu0 %v350
    %739 = vmatprep.subr.mxu0 0.0
    %740 = vmatpush1.msra.mxu0 %v351
    %741 = vmatprep.subr.mxu0 0.0
    %742 = vmatpush1.msra.mxu0 %v352
    %743 = vmatprep.subr.mxu0 0.0
    %744 = vmatpush1.msra.mxu0 %v353
    %745 = vmatprep.subr.mxu0 0.0
    %746 = vmatpush1.msra.mxu0 %v354
    %747 = vmatprep.subr.mxu0 0.0
    %748 = vmatpush1.msra.mxu0 %v355
    %749 = vmatprep.subr.mxu0 0.0
    %750 = vmatpush1.msra.mxu0 0.0
    %751 = vmatprep.subr.mxu0 0.0
    %752 = vmatpush1.msra.mxu0 0.0
    %753 = vmatprep.subr.mxu0 0.0
    %754 = vmatpush1.msra.mxu0 0.0
    %755 = vmatprep.subr.mxu0 0.0
    %756 = vmatpush1.msra.mxu0 0.0
    %757 = vmatprep.subr.mxu0 0.0
    %758 = vmatpush1.msra.mxu0 0.0
    %759 = vmatprep.subr.mxu0 0.0
    %760 = vmatpush1.msra.mxu0 0.0
    %761 = vmatprep.subr.mxu0 0.0
    %762 = vmatpush1.msra.mxu0 0.0
    %763 = vmatprep.subr.mxu0 0.0
    %764 = vmatpush1.msra.mxu0 0.0
    %765 = vmatprep.subr.mxu0 0.0
    %766 = vmatpush1.msra.mxu0 0.0
    %767 = vmatprep.subr.mxu0 0.0
    %768 = vmatpush1.msra.mxu0 0.0
    %769 = vmatprep.subr.mxu0 0.0
    %770 = vmatpush1.msra.mxu0 0.0
    %771 = vmatprep.subr.mxu0 0.0
    %772 = vmatpush1.msra.mxu0 0.0
    %773 = vmatprep.subr.mxu0 0.0
    %774 = vmatpush1.msra.mxu0 0.0
    %775 = vmatprep.subr.mxu0 0.0
    %776 = vmatpush1.msra.mxu0 0.0
    %777 = vmatprep.subr.mxu0 0.0
    %778 = vmatpush1.msra.mxu0 0.0
    %779 = vmatprep.subr.mxu0 0.0
    %780 = vmatpush1.msra.mxu0 0.0
    %781 = vmatprep.mubr.f32.mxu0 0.0
    %782 = vmatmul.mubr.f32.gmra.mrb[0].mxu0 %v716
    %v783 = vpop.f32.mrb[0].mxu0
    %v784 = vadd.f32 0.0, %v783
    %v785 = vpop.f32.mrb[0].mxu0
    %786 = vdwg.mxu0
    %v787 = vadd.f32 %v337, %v784
    %v788 = vtanh.pop %v787
    %789 = vmatprep.subr.mxu0 0.0
    %790 = vmatpush1.msra.mxu0 %v340
    %791 = vmatprep.subr.mxu0 0.0
    %792 = vmatpush1.msra.mxu0 %v341
    %793 = vmatprep.subr.mxu0 0.0
    %794 = vmatpush1.msra.mxu0 %v342
    %795 = vmatprep.subr.mxu0 0.0
    %796 = vmatpush1.msra.mxu0 %v343
    %797 = vmatprep.subr.mxu0 0.0
    %798 = vmatpush1.msra.mxu0 %v344
    %799 = vmatprep.subr.mxu0 0.0
    %800 = vmatpush1.msra.mxu0 %v345
    %801 = vmatprep.subr.mxu0 0.0
    %802 = vmatpush1.msra.mxu0 %v346
    %803 = vmatprep.subr.mxu0 0.0
    %804 = vmatpush1.msra.mxu0 %v347
    %805 = vmatprep.subr.mxu0 0.0
    %806 = vmatpush1.msra.mxu0 %v348
    %807 = vmatprep.subr.mxu0 0.0
    %808 = vmatpush1.msra.mxu0 %v349
    %809 = vmatprep.subr.mxu0 0.0
    %810 = vmatpush1.msra.mxu0 %v350
    %811 = vmatprep.subr.mxu0 0.0
    %812 = vmatpush1.msra.mxu0 %v351
    %813 = vmatprep.subr.mxu0 0.0
    %814 = vmatpush1.msra.mxu0 %v352
    %815 = vmatprep.subr.mxu0 0.0
    %816 = vmatpush1.msra.mxu0 %v353
    %817 = vmatprep.subr.mxu0 0.0
    %818 = vmatpush1.msra.mxu0 %v354
    %819 = vmatprep.subr.mxu0 0.0
    %820 = vmatpush1.msra.mxu0 %v355
    %821 = vmatprep.subr.mxu0 0.0
    %822 = vmatpush1.msra.mxu0 0.0
    %823 = vmatprep.subr.mxu0 0.0
    %824 = vmatpush1.msra.mxu0 0.0
    %825 = vmatprep.subr.mxu0 0.0
    %826 = vmatpush1.msra.mxu0 0.0
    %827 = vmatprep.subr.mxu0 0.0
    %828 = vmatpush1.msra.mxu0 0.0
    %829 = vmatprep.subr.mxu0 0.0
    %830 = vmatpush1.msra.mxu0 0.0
    %831 = vmatprep.subr.mxu0 0.0
    %832 = vmatpush1.msra.mxu0 0.0
    %833 = vmatprep.subr.mxu0 0.0
    %834 = vmatpush1.msra.mxu0 0.0
    %835 = vmatprep.subr.mxu0 0.0
    %836 = vmatpush1.msra.mxu0 0.0
    %837 = vmatprep.subr.mxu0 0.0
    %838 = vmatpush1.msra.mxu0 0.0
    %839 = vmatprep.subr.mxu0 0.0
    %840 = vmatpush1.msra.mxu0 0.0
    %841 = vmatprep.subr.mxu0 0.0
    %842 = vmatpush1.msra.mxu0 0.0
    %843 = vmatprep.subr.mxu0 0.0
    %844 = vmatpush1.msra.mxu0 0.0
    %845 = vmatprep.subr.mxu0 0.0
    %846 = vmatpush1.msra.mxu0 0.0
    %847 = vmatprep.subr.mxu0 0.0
    %848 = vmatpush1.msra.mxu0 0.0
    %849 = vmatprep.subr.mxu0 0.0
    %850 = vmatpush1.msra.mxu0 0.0
    %851 = vmatprep.subr.mxu0 0.0
    %852 = vmatpush1.msra.mxu0 0.0
    %853 = vmatprep.mubr.f32.mxu0 0.0
    %854 = vmatmul.mubr.f32.gmra.mrb[0].mxu0 %v788
    %v855 = vpop.f32.mrb[0].mxu0
    %v856 = vadd.f32 0.0, %v855
    %v857 = vpop.f32.mrb[0].mxu0
    %858 = vdwg.mxu0
    %v859 = vadd.f32 %v338, %v856
    %v860 = vtanh.pop %v859
    %861 = vmatprep.subr.mxu0 0.0
    %862 = vmatpush1.msra.mxu0 %v340
    %863 = vmatprep.subr.mxu0 0.0
    %864 = vmatpush1.msra.mxu0 %v341
    %865 = vmatprep.subr.mxu0 0.0
    %866 = vmatpush1.msra.mxu0 %v342
    %867 = vmatprep.subr.mxu0 0.0
    %868 = vmatpush1.msra.mxu0 %v343
    %869 = vmatprep.subr.mxu0 0.0
    %870 = vmatpush1.msra.mxu0 %v344
    %871 = vmatprep.subr.mxu0 0.0
    %872 = vmatpush1.msra.mxu0 %v345
    %873 = vmatprep.subr.mxu0 0.0
    %874 = vmatpush1.msra.mxu0 %v346
    %875 = vmatprep.subr.mxu0 0.0
    %876 = vmatpush1.msra.mxu0 %v347
    %877 = vmatprep.subr.mxu0 0.0
    %878 = vmatpush1.msra.mxu0 %v348
    %879 = vmatprep.subr.mxu0 0.0
    %880 = vmatpush1.msra.mxu0 %v349
    %881 = vmatprep.subr.mxu0 0.0
    %882 = vmatpush1.msra.mxu0 %v350
    %883 = vmatprep.subr.mxu0 0.0
    %884 = vmatpush1.msra.mxu0 %v351
    %885 = vmatprep.subr.mxu0 0.0
    %886 = vmatpush1.msra.mxu0 %v352
    %887 = vmatprep.subr.mxu0 0.0
    %888 = vmatpush1.msra.mxu0 %v353
    %889 = vmatprep.subr.mxu0 0.0
    %890 = vmatpush1.msra.mxu0 %v354
    %891 = vmatprep.subr.mxu0 0.0
    %892 = vmatpush1.msra.mxu0 %v355
    %893 = vmatprep.subr.mxu0 0.0
    %894 = vmatpush1.msra.mxu0 0.0
    %895 = vmatprep.subr.mxu0 0.0
    %896 = vmatpush1.msra.mxu0 0.0
    %897 = vmatprep.subr.mxu0 0.0
    %898 = vmatpush1.msra.mxu0 0.0
    %899 = vmatprep.subr.mxu0 0.0
    %900 = vmatpush1.msra.mxu0 0.0
    %901 = vmatprep.subr.mxu0 0.0
    %902 = vmatpush1.msra.mxu0 0.0
    %903 = vmatprep.subr.mxu0 0.0
    %904 = vmatpush1.msra.mxu0 0.0
    %905 = vmatprep.subr.mxu0 0.0
    %906 = vmatpush1.msra.mxu0 0.0
    %907 = vmatprep.subr.mxu0 0.0
    %908 = vmatpush1.msra.mxu0 0.0
    %909 = vmatprep.subr.mxu0 0.0
    %910 = vmatpush1.msra.mxu0 0.0
    %911 = vmatprep.subr.mxu0 0.0
    %912 = vmatpush1.msra.mxu0 0.0
    %913 = vmatprep.subr.mxu0 0.0
    %914 = vmatpush1.msra.mxu0 0.0
    %915 = vmatprep.subr.mxu0 0.0
    %916 = vmatpush1.msra.mxu0 0.0
    %917 = vmatprep.subr.mxu0 0.0
    %918 = vmatpush1.msra.mxu0 0.0
    %919 = vmatprep.subr.mxu0 0.0
    %920 = vmatpush1.msra.mxu0 0.0
    %921 = vmatprep.subr.mxu0 0.0
    %922 = vmatpush1.msra.mxu0 0.0
    %923 = vmatprep.subr.mxu0 0.0
    %924 = vmatpush1.msra.mxu0 0.0
    %925 = vmatprep.mubr.f32.mxu0 0.0
    %926 = vmatmul.mubr.f32.gmra.mrb[0].mxu0 %v860
    %v927 = vpop.f32.mrb[0].mxu0
    %v928 = vadd.f32 0.0, %v927
    %v929 = vpop.f32.mrb[0].mxu0
    %930 = vdwg.mxu0
    %v931 = vadd.f32 %v339, %v928
    %v932 = vtanh.pop %v931
    %933 = vst [vmem:[#allocation2] sm:$0xff] %v932
    // Predicated region
    $region54: #{rnn_model_forward.1} parent=1 // pred_check
      %p934 = pneg %p100
    $region55: #{rnn_model_forward.1} parent=1 // pred_check_branch
      %936 = sbr.rel (%p934) target = $region57
    $region56: #{rnn_model_forward.1} parent=1 // pred_region
      %v937 = vld [vmem:[#allocation11] sm:$0xff]
      %v938 = vld [vmem:[#allocation11 + $0x8] sm:$0xff]
      %v939 = vld [vmem:[#allocation11 + $0x10] sm:$0xff]
      %v940 = vld [vmem:[#allocation11 + $0x18] sm:$0xff]
      %v941 = vld [vmem:[#allocation11 + $0x20] sm:$0xff]
      %v942 = vld [vmem:[#allocation11 + $0x28] sm:$0xff]
      %v943 = vld [vmem:[#allocation11 + $0x30] sm:$0xff]
      %v944 = vld [vmem:[#allocation11 + $0x38] sm:$0xff]
      %v945 = vld [vmem:[#allocation11 + $0x40] sm:$0xff]
      %v946 = vld [vmem:[#allocation11 + $0x48] sm:$0xff]
      %v947 = vld [vmem:[#allocation11 + $0x50] sm:$0xff]
      %v948 = vld [vmem:[#allocation11 + $0x58] sm:$0xff]
      %v949 = vld [vmem:[#allocation11 + $0x60] sm:$0xff]
      %v950 = vld [vmem:[#allocation11 + $0x68] sm:$0xff]
      %v951 = vld [vmem:[#allocation11 + $0x70] sm:$0xff]
      %v952 = vld [vmem:[#allocation11 + $0x78] sm:$0xff]
      %v953 = vld [vmem:[#allocation12] sm:$0x1]
      %v955 = vlaneseq
      %v956 = vshrl.u32 %v955, 7
      %v957 = vsub.s32 0, %v956
      %v958 = vrot.slane %v953, %v957
      %960 = vmatprep.subr.mxu0 0.0
      %961 = vmatpush1.msra.mxu0 %v937
      %962 = vmatprep.subr.mxu0 0.0
      %963 = vmatpush1.msra.mxu0 %v938
      %964 = vmatprep.subr.mxu0 0.0
      %965 = vmatpush1.msra.mxu0 %v939
      %966 = vmatprep.subr.mxu0 0.0
      %967 = vmatpush1.msra.mxu0 %v940
      %968 = vmatprep.subr.mxu0 0.0
      %969 = vmatpush1.msra.mxu0 %v941
      %970 = vmatprep.subr.mxu0 0.0
      %971 = vmatpush1.msra.mxu0 %v942
      %972 = vmatprep.subr.mxu0 0.0
      %973 = vmatpush1.msra.mxu0 %v943
      %974 = vmatprep.subr.mxu0 0.0
      %975 = vmatpush1.msra.mxu0 %v944
      %976 = vmatprep.subr.mxu0 0.0
      %977 = vmatpush1.msra.mxu0 %v945
      %978 = vmatprep.subr.mxu0 0.0
      %979 = vmatpush1.msra.mxu0 %v946
      %980 = vmatprep.subr.mxu0 0.0
      %981 = vmatpush1.msra.mxu0 %v947
      %982 = vmatprep.subr.mxu0 0.0
      %983 = vmatpush1.msra.mxu0 %v948
      %984 = vmatprep.subr.mxu0 0.0
      %985 = vmatpush1.msra.mxu0 %v949
      %986 = vmatprep.subr.mxu0 0.0
      %987 = vmatpush1.msra.mxu0 %v950
      %988 = vmatprep.subr.mxu0 0.0
      %989 = vmatpush1.msra.mxu0 %v951
      %990 = vmatprep.subr.mxu0 0.0
      %991 = vmatpush1.msra.mxu0 %v952
      %992 = vmatprep.subr.mxu0 0.0
      %993 = vmatpush1.msra.mxu0 0.0
      %994 = vmatprep.subr.mxu0 0.0
      %995 = vmatpush1.msra.mxu0 0.0
      %996 = vmatprep.subr.mxu0 0.0
      %997 = vmatpush1.msra.mxu0 0.0
      %998 = vmatprep.subr.mxu0 0.0
      %999 = vmatpush1.msra.mxu0 0.0
      %1000 = vmatprep.subr.mxu0 0.0
      %1001 = vmatpush1.msra.mxu0 0.0
      %1002 = vmatprep.subr.mxu0 0.0
      %1003 = vmatpush1.msra.mxu0 0.0
      %1004 = vmatprep.subr.mxu0 0.0
      %1005 = vmatpush1.msra.mxu0 0.0
      %1006 = vmatprep.subr.mxu0 0.0
      %1007 = vmatpush1.msra.mxu0 0.0
      %1008 = vmatprep.subr.mxu0 0.0
      %1009 = vmatpush1.msra.mxu0 0.0
      %1010 = vmatprep.subr.mxu0 0.0
      %1011 = vmatpush1.msra.mxu0 0.0
      %1012 = vmatprep.subr.mxu0 0.0
      %1013 = vmatpush1.msra.mxu0 0.0
      %1014 = vmatprep.subr.mxu0 0.0
      %1015 = vmatpush1.msra.mxu0 0.0
      %1016 = vmatprep.subr.mxu0 0.0
      %1017 = vmatpush1.msra.mxu0 0.0
      %1018 = vmatprep.subr.mxu0 0.0
      %1019 = vmatpush1.msra.mxu0 0.0
      %1020 = vmatprep.subr.mxu0 0.0
      %1021 = vmatpush1.msra.mxu0 0.0
      %1022 = vmatprep.subr.mxu0 0.0
      %1023 = vmatpush1.msra.mxu0 0.0
      %1024 = vmatprep.mubr.f32.mxu0 0.0
      %1025 = vmatmul.mubr.f32.gmra.mrb[0].mxu0 %v932
      %v1026 = vpop.f32.mrb[0].mxu0
      %v1027 = vadd.f32 %v958, %v1026
      %v1028 = vpop.f32.mrb[0].mxu0
      %1029 = vdwg.mxu0
      %1030 = vst [vmem:[#allocation14] sm:$0xff] %v1027
    $region57: #{rnn_model_forward.1} parent=1 // pred_fallthru
      _
    // Predicated region
    $region58: #{rnn_model_forward.1} parent=1 // pred_check
      _
    $region59: #{rnn_model_forward.1} parent=1 // pred_check_branch
      %1032 = sbr.rel (0) target = $region61
    $region60: #{rnn_model_forward.1} parent=1 // pred_region
      %s1034 = ssub.s32 128, 128
      %1035 = vsyncadd [#allocation5], %s1034
      %s1037 = sshll.u32 [#allocation14], 4
      %s1038 = int_to_ptr.vmem [resolvable:$true] %s1037
      %1040 = dma.vmem_to_hbm [thread:$0]  %s1038, 128, %s6, [#allocation5]
    $region61: #{rnn_model_forward.1} parent=1 // pred_fallthru
      _
    // Predicated region
    $region62: #{rnn_model_forward.1} parent=1 // pred_check
      _
    $region63: #{rnn_model_forward.1} parent=1 // pred_check_branch
      %1042 = sbr.rel (0) target = $region65
    $region64: #{rnn_model_forward.1} parent=1 // pred_region
      %1043 = dma.done [#allocation5], 128
    $region65: #{rnn_model_forward.1} parent=1 // pred_fallthru
      _
    %1044 = vsyncpa [#allocation4], 1
    %1045 = vsyncpa [#allocation7], 1
    %1046 = vsyncpa [#allocation10], 1
    %1047 = vsyncpa [#allocation13], 1
    %1048 = vsyncpa [#allocation5], 1

</llo_original>
